<compile_context>
chip_gen: v7x
topology: tpu7x:2x2x1
jax: 0.10.0
libtpu: 0.0.40
codegen_flags: <defaults>
</compile_context>

<pallas_src>
import functools

import jax
import jax.numpy as jnp
from jax.experimental import pallas as pl
from jax.experimental.pallas import tpu as pltpu


# ----------------------------- configuration --------------------------------
FEATURE_NAMES = [f"feat_{i}" for i in range(8)]
INPUT_DIM = len(FEATURE_NAMES)          # 8
LAYER_DIMS = [32, 64, 32]               # legacy 32-64-32 architecture
LIP_CONST = 1.0
DEPTH = len(LAYER_DIMS) + 1             # number of Linear layers
MAX_NORM = float(LIP_CONST) ** (1.0 / DEPTH)
SIGMA = float(LIP_CONST)
BATCH = 8
MONOTONIC = False                       # reference-module configuration
# monotonic=False -> all-zero monotone constraints (kept only for the reference)
MONOTONE_CONSTRAINTS = jnp.zeros((1, INPUT_DIM), jnp.float32)
# TODO(synk): _load_monotone_constrs reads a YAML config file; no in-kernel
# equivalent (and unused since monotonic=False), so constraints stay zeros.


# ------------------------------- kernel --------------------------------------
def _lipschitz_mlp_kernel(sigma, use_mono,
                          x_ref,
                          w1_ref, b1_ref,
                          w2_ref, b2_ref,
                          w3_ref, b3_ref,
                          w4_ref, b4_ref,
                          *rest):
    """Transposed layout: x_ref is (in, tb), weights are (out, in) in the
    pair-permuted basis (see prepare_params), biases are (out, 1), and the
    output block is a lane-dense (1, tb) row."""
    if use_mono:
        c_ref, o_ref = rest
    else:
        (o_ref,) = rest

    x = x_ref[...]                                    # (in, tb)

    def dense(h, w_ref, b_ref):
        # W(out, in) @ h(in, tb) on the MXU, f32 accumulation, f32 bias add.
        return jnp.dot(w_ref[...], h,
                       preferred_element_type=jnp.float32) + b_ref[...]

    def groupsort2(h):
        # GroupSort(n_groups = dim // 2) in the pair-permuted feature basis:
        # partner pairs are (row i, row i + n/2), so the activation is a
        # half-split min/max plus an 8-sublane-aligned concatenate.  No rolls,
        # masks or selects needed (the permutation lives in the weights).
        n2 = h.shape[0] // 2
        top = h[:n2, :]
        bot = h[n2:, :]
        return jnp.concatenate(
            [jnp.minimum(top, bot), jnp.maximum(top, bot)], axis=0)

    h = groupsort2(dense(x, w1_ref, b1_ref))          # (32, tb)
    h = groupsort2(dense(h, w2_ref, b2_ref))          # (64, tb)
    h = groupsort2(dense(h, w3_ref, b3_ref))          # (32, tb)

    # Final (32 -> 1) layer: zero-padded to 8 output rows so the MXU matmul is
    # sublane-aligned; row 0 is the real output -> lane-dense (1, tb) result.
    z4 = jnp.dot(w4_ref[...], h, preferred_element_type=jnp.float32)   # (8, tb)
    out = z4[0:1, :] + b4_ref[...]                    # (1, tb)

    if use_mono:
        # SigmaNet: + sigma * sum_k(x_k * monotone_constraints_k) per column.
        out = out + sigma * jnp.sum(x * c_ref[...], axis=0, keepdims=True)

    o_ref[...] = out


# ------------------------------ wrapper ---------------------------------------
def _direct_norm_one(w, max_norm):
    """direct_norm(kind='one', vectorwise): clamp the per-input-feature column
    1-norm of the torch (out, in) weight == per-row |.| sum of our (in, out) W."""
    col_norm = jnp.sum(jnp.abs(w), axis=1, keepdims=True)        # (in, 1)
    return w / jnp.maximum(1.0, col_norm / max_norm)


def _pair_perm(n):
    """Permutation putting even feature indices in the top half and odd in the
    bottom half, so GroupSort-2's adjacent pairs (2i, 2i+1) become (i, i + n/2)."""
    return jnp.concatenate([jnp.arange(0, n, 2), jnp.arange(1, n, 2)])


def prepare_params(params, max_norm=MAX_NORM, dtype=jnp.float32):
    """Hoisted per-weight-update work (cache the result for repeated inference):
    Lipschitz normalisation, transpose to (out, in), folding the GroupSort pair
    permutation into the weights, and an optional dtype cast of the MXU
    operands (pass dtype=jnp.bfloat16 together with bf16 inputs to halve the
    dominant x HBM traffic at large batch; f32 default keeps numerics tight)."""
    (w1, b1), (w2, b2), (w3, b3), (w4, b4) = params

    w1t = _direct_norm_one(w1, max_norm).T            # (32, 8)
    w2t = _direct_norm_one(w2, max_norm).T            # (64, 32)
    w3t = _direct_norm_one(w3, max_norm).T            # (32, 64)
    w4t = _direct_norm_one(w4, max_norm).T            # (1, 32)

    p1 = _pair_perm(w1t.shape[0])                     # n = 32
    p2 = _pair_perm(w2t.shape[0])                     # n = 64
    p3 = _pair_perm(w3t.shape[0])                     # n = 32

    # Permute each layer's output rows; undo it on the next layer's input cols.
    w1p = w1t[p1, :]
    w2p = w2t[p2, :][:, p1]
    w3p = w3t[p3, :][:, p2]
    w4p = w4t[:, p3]
    b1p = b1.reshape(-1, 1)[p1, :]
    b2p = b2.reshape(-1, 1)[p2, :]
    b3p = b3.reshape(-1, 1)[p3, :]
    b4p = b4.reshape(1, 1)

    # Zero-pad the 1-row final weight to 8 rows (sublane-aligned MXU matmul).
    w4_pad = jnp.pad(w4p, ((0, 7), (0, 0)))

    f32 = jnp.float32
    return (w1p.astype(dtype), b1p.astype(f32),
            w2p.astype(dtype), b2p.astype(f32),
            w3p.astype(dtype), b3p.astype(f32),
            w4_pad.astype(dtype), b4p.astype(f32))


def lipschitz_legacy_net_forward(x, prepared, constraints=None,
                                 monotonic=MONOTONIC, batch_tile=4096):
    """x: (batch, input_dim).  For real deployments batch several thousand rows
    per call (ideally already laid out as (input_dim, batch), bf16) -- at
    batch=8 the kernel is pure launch overhead."""
    w1, b1, w2, b2, w3, b3, w4, b4 = prepared
    batch, in_dim = x.shape

    xt = x.T                                          # (in, batch): batch on lanes
    tb = batch if batch <= batch_tile else batch_tile
    if batch > tb:
        assert batch % tb == 0, "batch must be a multiple of the batch tile"
        assert tb % 128 == 0, "batch tile must be lane-aligned (multiple of 128)"
    use_mono = bool(monotonic) and constraints is not None

    kernel = functools.partial(_lipschitz_mlp_kernel, SIGMA, use_mono)

    def resident(a):
        # Whole-array block, same block every step -> DMA'd once, VMEM-resident.
        nd = a.ndim
        return pl.BlockSpec(a.shape, lambda i, _nd=nd: (0,) * _nd)

    operands = [xt, w1, b1, w2, b2, w3, b3, w4, b4]
    in_specs = [pl.BlockSpec((in_dim, tb), lambda i: (0, i))]
    in_specs += [resident(a) for a in operands[1:]]
    if use_mono:
        c = jnp.asarray(constraints, jnp.float32).reshape(in_dim, 1)
        operands.append(c)
        in_specs.append(resident(c))

    out_row = pl.pallas_call(
        kernel,
        out_shape=jax.ShapeDtypeStruct((1, batch), jnp.float32),
        grid=(batch // tb,),
        in_specs=in_specs,
        # Lane-dense output row: unmasked stores once tb is a multiple of 128.
        out_specs=pl.BlockSpec((1, tb), lambda i: (0, i)),
        # Batch tiles are independent.
        # TODO(synk): on v7x confirm in xprof that this axis shards across both
        # TensorCores; switch to pltpu.CORE_PARALLEL if one TC stays idle, and
        # set vmem_limit_bytes explicitly if batch_tile is pushed past ~16K
        # (v7x: 64 MiB physical / 32 MiB scoped default).
        compiler_params=pltpu.CompilerParams(
            dimension_semantics=("parallel",)),
    )(*operands)

    return out_row.reshape(batch, 1)


# --------------------------- params / reference -------------------------------
def init_params(key, dims):
    """Deterministic torch-default-style init: U(-1/sqrt(fan_in), 1/sqrt(fan_in))."""
    params = []
    for i in range(len(dims) - 1):
        fan_in, fan_out = dims[i], dims[i + 1]
        key, kw, kb = jax.random.split(key, 3)
        bound = 1.0 / (fan_in ** 0.5)
        w = jax.random.uniform(kw, (fan_in, fan_out), jnp.float32, -bound, bound)
        b = jax.random.uniform(kb, (1, fan_out), jnp.float32, -bound, bound)
        params.append((w, b))
    return params


def reference_forward(x, params, constraints):
    """Pure-JAX (f32) replica of LipschitzLegacyNet.forward for validation."""
    h = x
    n = len(params)
    for i, (w, b) in enumerate(params):
        wn = _direct_norm_one(w, MAX_NORM)
        h = h @ wn + b
        if i < n - 1:                                  # GroupSort(dim // 2)
            bsz, hdim = h.shape
            h = jnp.sort(h.reshape(bsz, hdim // 2, 2), axis=-1).reshape(bsz, hdim)
    return h + SIGMA * jnp.sum(x * constraints, axis=-1, keepdims=True)


# --------------------------------- main ---------------------------------------
if __name__ == "__main__":
    key = jax.random.PRNGKey(0)
    key, kx = jax.random.split(key)
    x = jax.random.normal(kx, (BATCH, INPUT_DIM), jnp.float32)

    dims = [INPUT_DIM] + LAYER_DIMS + [1]
    params = init_params(jax.random.PRNGKey(0), dims)
    prepared = prepare_params(params)

    out = lipschitz_legacy_net_forward(x, prepared)
    out = jax.block_until_ready(out)

    ref = reference_forward(x, params, MONOTONE_CONSTRAINTS)
    assert out.shape == (BATCH, 1), out.shape
    # Default-precision MXU (bf16 passes) in both kernel and reference ->
    # moderate tolerance even with the all-f32 operand path.
    assert jnp.allclose(out, ref, rtol=2e-2, atol=2e-2), (out, ref)

    print("KERNEL_OK")
</pallas_src>

<mosaic_0001>
module attributes {stable_mosaic.version = 11 : i64} {
  func.func @_lipschitz_mlp_kernel(%arg0: i32, %arg1: memref<8x8xf32, #tpu.memory_space<vmem>>, %arg2: memref<32x8xf32, #tpu.memory_space<vmem>>, %arg3: memref<32x1xf32, #tpu.memory_space<vmem>>, %arg4: memref<64x32xf32, #tpu.memory_space<vmem>>, %arg5: memref<64x1xf32, #tpu.memory_space<vmem>>, %arg6: memref<32x64xf32, #tpu.memory_space<vmem>>, %arg7: memref<32x1xf32, #tpu.memory_space<vmem>>, %arg8: memref<8x32xf32, #tpu.memory_space<vmem>>, %arg9: memref<1x1xf32, #tpu.memory_space<vmem>>, %arg10: memref<1x8xf32, #tpu.memory_space<vmem>>) attributes {dimension_semantics = [#tpu.dimension_semantics<parallel>], iteration_bounds = array<i64: 1>, scalar_prefetch = 0 : i64, scratch_operands = 0 : i64, tpu.core_type = #tpu.core_type<tc>, window_params = [{transform_indices = @transform_0, window_bounds = array<i64: 8, 8>}, {pipeline_mode = #tpu.pipeline_mode<synchronous>, transform_indices = @transform_1, window_bounds = array<i64: 32, 8>}, {pipeline_mode = #tpu.pipeline_mode<synchronous>, transform_indices = @transform_2, window_bounds = array<i64: 32, 1>}, {pipeline_mode = #tpu.pipeline_mode<synchronous>, transform_indices = @transform_3, window_bounds = array<i64: 64, 32>}, {pipeline_mode = #tpu.pipeline_mode<synchronous>, transform_indices = @transform_4, window_bounds = array<i64: 64, 1>}, {pipeline_mode = #tpu.pipeline_mode<synchronous>, transform_indices = @transform_5, window_bounds = array<i64: 32, 64>}, {pipeline_mode = #tpu.pipeline_mode<synchronous>, transform_indices = @transform_6, window_bounds = array<i64: 32, 1>}, {pipeline_mode = #tpu.pipeline_mode<synchronous>, transform_indices = @transform_7, window_bounds = array<i64: 8, 32>}, {pipeline_mode = #tpu.pipeline_mode<synchronous>, transform_indices = @transform_8, window_bounds = array<i64: 1, 1>}, {transform_indices = @transform_9, window_bounds = array<i64: 1, 8>}]} {
    %c0 = arith.constant 0 : index
    %c0_0 = arith.constant 0 : index
    %0 = vector.load %arg1[%c0, %c0_0] : memref<8x8xf32, #tpu.memory_space<vmem>>, vector<8x8xf32>
    %c0_1 = arith.constant 0 : index
    %c0_2 = arith.constant 0 : index
    %1 = vector.load %arg2[%c0_1, %c0_2] : memref<32x8xf32, #tpu.memory_space<vmem>>, vector<32x8xf32>
    %cst = arith.constant dense<0.000000e+00> : vector<32x8xf32>
    %2 = tpu.matmul %1, %0, %cst {dimension_numbers = #tpu.dot_dimension_numbers<[1], [0], [0], [1], [0, 0, 1, 1], [], []>} : vector<32x8xf32>, vector<8x8xf32>, vector<32x8xf32> -> vector<32x8xf32>
    %c0_3 = arith.constant 0 : index
    %c0_4 = arith.constant 0 : index
    %3 = vector.load %arg3[%c0_3, %c0_4] : memref<32x1xf32, #tpu.memory_space<vmem>>, vector<32x1xf32>
    %4 = vector.broadcast %3 : vector<32x1xf32> to vector<32x8xf32>
    %5 = arith.addf %2, %4 : vector<32x8xf32>
    %6 = vector.extract_strided_slice %5 {offsets = [0, 0], sizes = [16, 8], strides = [1, 1]} : vector<32x8xf32> to vector<16x8xf32>
    %7 = vector.extract_strided_slice %5 {offsets = [16, 0], sizes = [16, 8], strides = [1, 1]} : vector<32x8xf32> to vector<16x8xf32>
    %8 = arith.minimumf %6, %7 : vector<16x8xf32>
    %9 = arith.maximumf %6, %7 : vector<16x8xf32>
    %10 = tpu.concatenate %8, %9 in 0 : vector<16x8xf32>, vector<16x8xf32> -> vector<32x8xf32>
    %c0_5 = arith.constant 0 : index
    %c0_6 = arith.constant 0 : index
    %11 = vector.load %arg4[%c0_5, %c0_6] : memref<64x32xf32, #tpu.memory_space<vmem>>, vector<64x32xf32>
    %cst_7 = arith.constant dense<0.000000e+00> : vector<64x8xf32>
    %12 = tpu.matmul %11, %10, %cst_7 {dimension_numbers = #tpu.dot_dimension_numbers<[1], [0], [0], [1], [0, 0, 1, 1], [], []>} : vector<64x32xf32>, vector<32x8xf32>, vector<64x8xf32> -> vector<64x8xf32>
    %c0_8 = arith.constant 0 : index
    %c0_9 = arith.constant 0 : index
    %13 = vector.load %arg5[%c0_8, %c0_9] : memref<64x1xf32, #tpu.memory_space<vmem>>, vector<64x1xf32>
    %14 = vector.broadcast %13 : vector<64x1xf32> to vector<64x8xf32>
    %15 = arith.addf %12, %14 : vector<64x8xf32>
    %16 = vector.extract_strided_slice %15 {offsets = [0, 0], sizes = [32, 8], strides = [1, 1]} : vector<64x8xf32> to vector<32x8xf32>
    %17 = vector.extract_strided_slice %15 {offsets = [32, 0], sizes = [32, 8], strides = [1, 1]} : vector<64x8xf32> to vector<32x8xf32>
    %18 = arith.minimumf %16, %17 : vector<32x8xf32>
    %19 = arith.maximumf %16, %17 : vector<32x8xf32>
    %20 = tpu.concatenate %18, %19 in 0 : vector<32x8xf32>, vector<32x8xf32> -> vector<64x8xf32>
    %c0_10 = arith.constant 0 : index
    %c0_11 = arith.constant 0 : index
    %21 = vector.load %arg6[%c0_10, %c0_11] : memref<32x64xf32, #tpu.memory_space<vmem>>, vector<32x64xf32>
    %cst_12 = arith.constant dense<0.000000e+00> : vector<32x8xf32>
    %22 = tpu.matmul %21, %20, %cst_12 {dimension_numbers = #tpu.dot_dimension_numbers<[1], [0], [0], [1], [0, 0, 1, 1], [], []>} : vector<32x64xf32>, vector<64x8xf32>, vector<32x8xf32> -> vector<32x8xf32>
    %c0_13 = arith.constant 0 : index
    %c0_14 = arith.constant 0 : index
    %23 = vector.load %arg7[%c0_13, %c0_14] : memref<32x1xf32, #tpu.memory_space<vmem>>, vector<32x1xf32>
    %24 = vector.broadcast %23 : vector<32x1xf32> to vector<32x8xf32>
    %25 = arith.addf %22, %24 : vector<32x8xf32>
    %26 = vector.extract_strided_slice %25 {offsets = [0, 0], sizes = [16, 8], strides = [1, 1]} : vector<32x8xf32> to vector<16x8xf32>
    %27 = vector.extract_strided_slice %25 {offsets = [16, 0], sizes = [16, 8], strides = [1, 1]} : vector<32x8xf32> to vector<16x8xf32>
    %28 = arith.minimumf %26, %27 : vector<16x8xf32>
    %29 = arith.maximumf %26, %27 : vector<16x8xf32>
    %30 = tpu.concatenate %28, %29 in 0 : vector<16x8xf32>, vector<16x8xf32> -> vector<32x8xf32>
    %c0_15 = arith.constant 0 : index
    %c0_16 = arith.constant 0 : index
    %31 = vector.load %arg8[%c0_15, %c0_16] : memref<8x32xf32, #tpu.memory_space<vmem>>, vector<8x32xf32>
    %cst_17 = arith.constant dense<0.000000e+00> : vector<8x8xf32>
    %32 = tpu.matmul %31, %30, %cst_17 {dimension_numbers = #tpu.dot_dimension_numbers<[1], [0], [0], [1], [0, 0, 1, 1], [], []>} : vector<8x32xf32>, vector<32x8xf32>, vector<8x8xf32> -> vector<8x8xf32>
    %33 = vector.extract_strided_slice %32 {offsets = [0, 0], sizes = [1, 8], strides = [1, 1]} : vector<8x8xf32> to vector<1x8xf32>
    %c0_18 = arith.constant 0 : index
    %c0_19 = arith.constant 0 : index
    %34 = vector.load %arg9[%c0_18, %c0_19] : memref<1x1xf32, #tpu.memory_space<vmem>>, vector<1x1xf32>
    %35 = vector.broadcast %34 : vector<1x1xf32> to vector<1x8xf32>
    %36 = arith.addf %33, %35 : vector<1x8xf32>
    %c0_20 = arith.constant 0 : index
    %c0_21 = arith.constant 0 : index
    %37 = vector.load %arg10[%c0_20, %c0_21] : memref<1x8xf32, #tpu.memory_space<vmem>>, vector<1x8xf32>
    tpu.vector_store %arg10[%c0_20, %c0_21], %36 {strides = array<i32>} : memref<1x8xf32, #tpu.memory_space<vmem>>, vector<1x8xf32>,
    return
  }
  func.func @transform_0(%arg0: i32) -> (i32, i32) {
    %c0_i32 = arith.constant 0 : i32
    %c0_i32_0 = arith.constant 0 : i32
    return %c0_i32, %arg0 : i32, i32
  }
  func.func @transform_1(%arg0: i32) -> (i32, i32) {
    %c0_i32 = arith.constant 0 : i32
    %c0_i32_0 = arith.constant 0 : i32
    %c0_i32_1 = arith.constant 0 : i32
    return %c0_i32, %c0_i32_0 : i32, i32
  }
  func.func @transform_2(%arg0: i32) -> (i32, i32) {
    %c0_i32 = arith.constant 0 : i32
    %c0_i32_0 = arith.constant 0 : i32
    %c0_i32_1 = arith.constant 0 : i32
    return %c0_i32, %c0_i32_0 : i32, i32
  }
  func.func @transform_3(%arg0: i32) -> (i32, i32) {
    %c0_i32 = arith.constant 0 : i32
    %c0_i32_0 = arith.constant 0 : i32
    %c0_i32_1 = arith.constant 0 : i32
    return %c0_i32, %c0_i32_0 : i32, i32
  }
  func.func @transform_4(%arg0: i32) -> (i32, i32) {
    %c0_i32 = arith.constant 0 : i32
    %c0_i32_0 = arith.constant 0 : i32
    %c0_i32_1 = arith.constant 0 : i32
    return %c0_i32, %c0_i32_0 : i32, i32
  }
  func.func @transform_5(%arg0: i32) -> (i32, i32) {
    %c0_i32 = arith.constant 0 : i32
    %c0_i32_0 = arith.constant 0 : i32
    %c0_i32_1 = arith.constant 0 : i32
    return %c0_i32, %c0_i32_0 : i32, i32
  }
  func.func @transform_6(%arg0: i32) -> (i32, i32) {
    %c0_i32 = arith.constant 0 : i32
    %c0_i32_0 = arith.constant 0 : i32
    %c0_i32_1 = arith.constant 0 : i32
    return %c0_i32, %c0_i32_0 : i32, i32
  }
  func.func @transform_7(%arg0: i32) -> (i32, i32) {
    %c0_i32 = arith.constant 0 : i32
    %c0_i32_0 = arith.constant 0 : i32
    %c0_i32_1 = arith.constant 0 : i32
    return %c0_i32, %c0_i32_0 : i32, i32
  }
  func.func @transform_8(%arg0: i32) -> (i32, i32) {
    %c0_i32 = arith.constant 0 : i32
    %c0_i32_0 = arith.constant 0 : i32
    %c0_i32_1 = arith.constant 0 : i32
    return %c0_i32, %c0_i32_0 : i32, i32
  }
  func.func @transform_9(%arg0: i32) -> (i32, i32) {
    %c0_i32 = arith.constant 0 : i32
    %c0_i32_0 = arith.constant 0 : i32
    return %c0_i32, %arg0 : i32, i32
  }
}

</mosaic_0001>

<llo_original>
// kernel: tpu_custom_call.1
$region0: #{tpu_custom_call.1}
  #allocation0 [shape = 'u32[]', space=smem, size = 0x4, offset = 0x4, fixed_abs, tag = 'smem constant byte address 0x4 - core index']
  #allocation1 [shape = 'u32[144,128]{1,0:T(1,128)}', space=vmem, size = 0x12000, scoped, tag = 'internal scratch']
  #allocation2 [shape = 'f32[1,1]{1,0:T(1,128)S(1)}', space=vmem, size = 0x200, scoped, tag = 'scoped memory for tpu_custom_call.1']
  %s0 = inlined_call_operand.vmem [shape: f32[8,8], index: 0, kind: input, shape index: {}]
  %s1 = inlined_call_operand.vmem [shape: f32[32,8], index: 1, kind: input, shape index: {}]
  %s2 = inlined_call_operand.vmem [shape: f32[32,1], index: 2, kind: input, shape index: {}]
  %s3 = inlined_call_operand.vmem [shape: f32[64,32], index: 3, kind: input, shape index: {}]
  %s4 = inlined_call_operand.vmem [shape: f32[64,1], index: 4, kind: input, shape index: {}]
  %s5 = inlined_call_operand.vmem [shape: f32[32,64], index: 5, kind: input, shape index: {}]
  %s6 = inlined_call_operand.vmem [shape: f32[32,1], index: 6, kind: input, shape index: {}]
  %s7 = inlined_call_operand.vmem [shape: f32[8,32], index: 7, kind: input, shape index: {}]
  %s8 = inlined_call_operand.<no memory space> [shape: f32[1,1], index: 8, kind: input, shape index: {}]
  %s9 = inlined_call_operand.hbm [shape: f32[1,8], index: 9, kind: output, shape index: {}]
  %s10 = sld [smem:[#allocation0]]
  $region46: #{tpu_custom_call.1} parent=0
    _
  %s12 = ssub.s32 1, %s10
  %s13 = scalar_select 0, %s12, %s10
  %v14 = vstv %s8
  %15 = vst [vmem:[#allocation2] sm:$0x1] %v14
  $region1: #{tpu_custom_call.1} parent=0
    #allocation3 [shape = 'u8[512]{0}', space=vmem, size = 0x400, scoped, tag = 'output window, operand 0, single buffered']
    #allocation4 [shape = 's32[1]{0}', space=sflag, size = 0x4, scoped, tag = 'scoped memory for tpu_custom_call.1']
    %16 = vsyncpa [#allocation4], 0
    // Predicated region
    $region2: #{tpu_custom_call.1} parent=1 // pred_check
      _
    $region3: #{tpu_custom_call.1} parent=1 // pred_check_branch
      %18 = sbr.rel (0) target = $region5
    $region4: #{tpu_custom_call.1} parent=1 // pred_region
      _
    $region5: #{tpu_custom_call.1} parent=1 // pred_fallthru
      _
    // Predicated region
    $region6: #{tpu_custom_call.1} parent=1 // pred_check
      _
    $region7: #{tpu_custom_call.1} parent=1 // pred_check_branch
      %20 = sbr.rel (0) target = $region9
    $region8: #{tpu_custom_call.1} parent=1 // pred_region
      _
    $region9: #{tpu_custom_call.1} parent=1 // pred_fallthru
      _
    // Predicated region
    $region10: #{tpu_custom_call.1} parent=1 // pred_check
      _
    $region11: #{tpu_custom_call.1} parent=1 // pred_check_branch
      %22 = sbr.rel (0) target = $region13
    $region12: #{tpu_custom_call.1} parent=1 // pred_region
      _
    $region13: #{tpu_custom_call.1} parent=1 // pred_fallthru
      _
    // Predicated region
    $region14: #{tpu_custom_call.1} parent=1 // pred_check
      _
    $region15: #{tpu_custom_call.1} parent=1 // pred_check_branch
      %24 = sbr.rel (0) target = $region17
    $region16: #{tpu_custom_call.1} parent=1 // pred_region
      _
    $region17: #{tpu_custom_call.1} parent=1 // pred_fallthru
      _
    // Predicated region
    $region18: #{tpu_custom_call.1} parent=1 // pred_check
      _
    $region19: #{tpu_custom_call.1} parent=1 // pred_check_branch
      %26 = sbr.rel (0) target = $region21
    $region20: #{tpu_custom_call.1} parent=1 // pred_region
      _
    $region21: #{tpu_custom_call.1} parent=1 // pred_fallthru
      _
    // Predicated region
    $region22: #{tpu_custom_call.1} parent=1 // pred_check
      _
    $region23: #{tpu_custom_call.1} parent=1 // pred_check_branch
      %28 = sbr.rel (0) target = $region25
    $region24: #{tpu_custom_call.1} parent=1 // pred_region
      _
    $region25: #{tpu_custom_call.1} parent=1 // pred_fallthru
      _
    // Predicated region
    $region26: #{tpu_custom_call.1} parent=1 // pred_check
      _
    $region27: #{tpu_custom_call.1} parent=1 // pred_check_branch
      %30 = sbr.rel (0) target = $region29
    $region28: #{tpu_custom_call.1} parent=1 // pred_region
      _
    $region29: #{tpu_custom_call.1} parent=1 // pred_fallthru
      _
    // Predicated region
    $region30: #{tpu_custom_call.1} parent=1 // pred_check
      _
    $region31: #{tpu_custom_call.1} parent=1 // pred_check_branch
      %32 = sbr.rel (0) target = $region33
    $region32: #{tpu_custom_call.1} parent=1 // pred_region
      _
    $region33: #{tpu_custom_call.1} parent=1 // pred_fallthru
      _
    // Predicated region
    $region34: #{tpu_custom_call.1} parent=1 // pred_check
      _
    $region35: #{tpu_custom_call.1} parent=1 // pred_check_branch
      %34 = sbr.rel (0) target = $region37
    $region36: #{tpu_custom_call.1} parent=1 // pred_region
      _
    $region37: #{tpu_custom_call.1} parent=1 // pred_fallthru
      _
    %v35 = vld [vmem:[%s0] sm:$0xff]
    %v36 = vld [vmem:[%s1] sm:$0xff]
    %v37 = vld [vmem:[%s1 + $0x8] sm:$0xff]
    %v38 = vld [vmem:[%s1 + $0x10] sm:$0xff]
    %v39 = vld [vmem:[%s1 + $0x18] sm:$0xff]
    %v40 = vld [vmem:[%s2] sm:$0xff]
    %v41 = vld [vmem:[%s2 + $0x8] sm:$0xff]
    %v42 = vld [vmem:[%s2 + $0x10] sm:$0xff]
    %v43 = vld [vmem:[%s2 + $0x18] sm:$0xff]
    %45 = vset.pattern.permute.xlu0 0
    %46 = vperm.xlu0 %45, %v40
    %v47 = vpop.permute.xlu0 %46
    %50 = vset.pattern.permute.xlu0 0
    %51 = vperm.xlu0 %50, %v41
    %v52 = vpop.permute.xlu0 %51
    %55 = vset.pattern.permute.xlu0 0
    %56 = vperm.xlu0 %55, %v42
    %v57 = vpop.permute.xlu0 %56
    %60 = vset.pattern.permute.xlu0 0
    %61 = vperm.xlu0 %60, %v43
    %v62 = vpop.permute.xlu0 %61
    %vm64 = vcmask 64512
    %v66 = vsel %vm64, %v36, 0
    %v69 = vsel %vm64, %v37, 0
    %v72 = vsel %vm64, %v38, 0
    %v75 = vsel %vm64, %v39, 0
    %77 = vmatprep.subr.mxu0 0.0
    %78 = vmatpush1.msra.mxu0 %v35
    %79 = vmatprep.subr.mxu0 0.0
    %80 = vmatpush1.msra.mxu0 0.0
    %81 = vmatprep.subr.mxu0 0.0
    %82 = vmatpush1.msra.mxu0 0.0
    %83 = vmatprep.subr.mxu0 0.0
    %84 = vmatpush1.msra.mxu0 0.0
    %85 = vmatprep.subr.mxu0 0.0
    %86 = vmatpush1.msra.mxu0 0.0
    %87 = vmatprep.subr.mxu0 0.0
    %88 = vmatpush1.msra.mxu0 0.0
    %89 = vmatprep.subr.mxu0 0.0
    %90 = vmatpush1.msra.mxu0 0.0
    %91 = vmatprep.subr.mxu0 0.0
    %92 = vmatpush1.msra.mxu0 0.0
    %93 = vmatprep.subr.mxu0 0.0
    %94 = vmatpush1.msra.mxu0 0.0
    %95 = vmatprep.subr.mxu0 0.0
    %96 = vmatpush1.msra.mxu0 0.0
    %97 = vmatprep.subr.mxu0 0.0
    %98 = vmatpush1.msra.mxu0 0.0
    %99 = vmatprep.subr.mxu0 0.0
    %100 = vmatpush1.msra.mxu0 0.0
    %101 = vmatprep.subr.mxu0 0.0
    %102 = vmatpush1.msra.mxu0 0.0
    %103 = vmatprep.subr.mxu0 0.0
    %104 = vmatpush1.msra.mxu0 0.0
    %105 = vmatprep.subr.mxu0 0.0
    %106 = vmatpush1.msra.mxu0 0.0
    %107 = vmatprep.subr.mxu0 0.0
    %108 = vmatpush1.msra.mxu0 0.0
    %109 = vmatprep.subr.mxu0 0.0
    %110 = vmatpush1.msra.mxu0 0.0
    %111 = vmatprep.subr.mxu0 0.0
    %112 = vmatpush1.msra.mxu0 0.0
    %113 = vmatprep.subr.mxu0 0.0
    %114 = vmatpush1.msra.mxu0 0.0
    %115 = vmatprep.subr.mxu0 0.0
    %116 = vmatpush1.msra.mxu0 0.0
    %117 = vmatprep.subr.mxu0 0.0
    %118 = vmatpush1.msra.mxu0 0.0
    %119 = vmatprep.subr.mxu0 0.0
    %120 = vmatpush1.msra.mxu0 0.0
    %121 = vmatprep.subr.mxu0 0.0
    %122 = vmatpush1.msra.mxu0 0.0
    %123 = vmatprep.subr.mxu0 0.0
    %124 = vmatpush1.msra.mxu0 0.0
    %125 = vmatprep.subr.mxu0 0.0
    %126 = vmatpush1.msra.mxu0 0.0
    %127 = vmatprep.subr.mxu0 0.0
    %128 = vmatpush1.msra.mxu0 0.0
    %129 = vmatprep.subr.mxu0 0.0
    %130 = vmatpush1.msra.mxu0 0.0
    %131 = vmatprep.subr.mxu0 0.0
    %132 = vmatpush1.msra.mxu0 0.0
    %133 = vmatprep.subr.mxu0 0.0
    %134 = vmatpush1.msra.mxu0 0.0
    %135 = vmatprep.subr.mxu0 0.0
    %136 = vmatpush1.msra.mxu0 0.0
    %137 = vmatprep.subr.mxu0 0.0
    %138 = vmatpush1.msra.mxu0 0.0
    %139 = vmatprep.subr.mxu0 0.0
    %140 = vmatpush1.msra.mxu0 0.0
    %141 = vmatprep.mubr.f32.mxu0 0.0
    %142 = vmatmul.mubr.f32.gmra.mrb[0].mxu0 %v66
    %v143 = vpop.f32.mrb[0].mxu0
    %v144 = vadd.f32 %v47, %v143
    %v145 = vpop.f32.mrb[0].mxu0
    %146 = vmatprep.mubr.f32.mxu0 0.0
    %147 = vmatmul.mubr.f32.gmra.mrb[0].mxu0 %v69
    %v148 = vpop.f32.mrb[0].mxu0
    %v149 = vadd.f32 %v52, %v148
    %v150 = vpop.f32.mrb[0].mxu0
    %151 = vmatprep.mubr.f32.mxu0 0.0
    %152 = vmatmul.mubr.f32.gmra.mrb[0].mxu0 %v72
    %v153 = vpop.f32.mrb[0].mxu0
    %v154 = vadd.f32 %v57, %v153
    %v155 = vpop.f32.mrb[0].mxu0
    %156 = vmatprep.mubr.f32.mxu0 0.0
    %157 = vmatmul.mubr.f32.gmra.mrb[0].mxu0 %v75
    %v158 = vpop.f32.mrb[0].mxu0
    %v159 = vadd.f32 %v62, %v158
    %v160 = vpop.f32.mrb[0].mxu0
    %161 = vdwg.mxu0
    %v162 = vmin.f32 %v144, %v154
    %v163 = vmin.f32 %v149, %v159
    %v164 = vmax.f32 %v144, %v154
    %v165 = vmax.f32 %v149, %v159
    %v166 = vld [vmem:[%s3] sm:$0xff]
    %v167 = vld [vmem:[%s3 + $0x8] sm:$0xff]
    %v168 = vld [vmem:[%s3 + $0x10] sm:$0xff]
    %v169 = vld [vmem:[%s3 + $0x18] sm:$0xff]
    %v170 = vld [vmem:[%s3 + $0x20] sm:$0xff]
    %v171 = vld [vmem:[%s3 + $0x28] sm:$0xff]
    %v172 = vld [vmem:[%s3 + $0x30] sm:$0xff]
    %v173 = vld [vmem:[%s3 + $0x38] sm:$0xff]
    %v174 = vld [vmem:[%s4] sm:$0xff]
    %v175 = vld [vmem:[%s4 + $0x8] sm:$0xff]
    %v176 = vld [vmem:[%s4 + $0x10] sm:$0xff]
    %v177 = vld [vmem:[%s4 + $0x18] sm:$0xff]
    %v178 = vld [vmem:[%s4 + $0x20] sm:$0xff]
    %v179 = vld [vmem:[%s4 + $0x28] sm:$0xff]
    %v180 = vld [vmem:[%s4 + $0x30] sm:$0xff]
    %v181 = vld [vmem:[%s4 + $0x38] sm:$0xff]
    %183 = vset.pattern.permute.xlu0 0
    %184 = vperm.xlu0 %183, %v174
    %v185 = vpop.permute.xlu0 %184
    %188 = vset.pattern.permute.xlu0 0
    %189 = vperm.xlu0 %188, %v175
    %v190 = vpop.permute.xlu0 %189
    %193 = vset.pattern.permute.xlu0 0
    %194 = vperm.xlu0 %193, %v176
    %v195 = vpop.permute.xlu0 %194
    %198 = vset.pattern.permute.xlu0 0
    %199 = vperm.xlu0 %198, %v177
    %v200 = vpop.permute.xlu0 %199
    %203 = vset.pattern.permute.xlu0 0
    %204 = vperm.xlu0 %203, %v178
    %v205 = vpop.permute.xlu0 %204
    %208 = vset.pattern.permute.xlu0 0
    %209 = vperm.xlu0 %208, %v179
    %v210 = vpop.permute.xlu0 %209
    %213 = vset.pattern.permute.xlu0 0
    %214 = vperm.xlu0 %213, %v180
    %v215 = vpop.permute.xlu0 %214
    %218 = vset.pattern.permute.xlu0 0
    %219 = vperm.xlu0 %218, %v181
    %v220 = vpop.permute.xlu0 %219
    %vm222 = vcmask 261120
    %v224 = vsel %vm222, %v166, 0
    %v227 = vsel %vm222, %v167, 0
    %v230 = vsel %vm222, %v168, 0
    %v233 = vsel %vm222, %v169, 0
    %v236 = vsel %vm222, %v170, 0
    %v239 = vsel %vm222, %v171, 0
    %v242 = vsel %vm222, %v172, 0
    %v245 = vsel %vm222, %v173, 0
    %247 = vmatprep.subr.mxu0 0.0
    %248 = vmatpush1.msra.mxu0 %v162
    %249 = vmatprep.subr.mxu0 0.0
    %250 = vmatpush1.msra.mxu0 %v163
    %251 = vmatprep.subr.mxu0 0.0
    %252 = vmatpush1.msra.mxu0 %v164
    %253 = vmatprep.subr.mxu0 0.0
    %254 = vmatpush1.msra.mxu0 %v165
    %255 = vmatprep.subr.mxu0 0.0
    %256 = vmatpush1.msra.mxu0 0.0
    %257 = vmatprep.subr.mxu0 0.0
    %258 = vmatpush1.msra.mxu0 0.0
    %259 = vmatprep.subr.mxu0 0.0
    %260 = vmatpush1.msra.mxu0 0.0
    %261 = vmatprep.subr.mxu0 0.0
    %262 = vmatpush1.msra.mxu0 0.0
    %263 = vmatprep.subr.mxu0 0.0
    %264 = vmatpush1.msra.mxu0 0.0
    %265 = vmatprep.subr.mxu0 0.0
    %266 = vmatpush1.msra.mxu0 0.0
    %267 = vmatprep.subr.mxu0 0.0
    %268 = vmatpush1.msra.mxu0 0.0
    %269 = vmatprep.subr.mxu0 0.0
    %270 = vmatpush1.msra.mxu0 0.0
    %271 = vmatprep.subr.mxu0 0.0
    %272 = vmatpush1.msra.mxu0 0.0
    %273 = vmatprep.subr.mxu0 0.0
    %274 = vmatpush1.msra.mxu0 0.0
    %275 = vmatprep.subr.mxu0 0.0
    %276 = vmatpush1.msra.mxu0 0.0
    %277 = vmatprep.subr.mxu0 0.0
    %278 = vmatpush1.msra.mxu0 0.0
    %279 = vmatprep.subr.mxu0 0.0
    %280 = vmatpush1.msra.mxu0 0.0
    %281 = vmatprep.subr.mxu0 0.0
    %282 = vmatpush1.msra.mxu0 0.0
    %283 = vmatprep.subr.mxu0 0.0
    %284 = vmatpush1.msra.mxu0 0.0
    %285 = vmatprep.subr.mxu0 0.0
    %286 = vmatpush1.msra.mxu0 0.0
    %287 = vmatprep.subr.mxu0 0.0
    %288 = vmatpush1.msra.mxu0 0.0
    %289 = vmatprep.subr.mxu0 0.0
    %290 = vmatpush1.msra.mxu0 0.0
    %291 = vmatprep.subr.mxu0 0.0
    %292 = vmatpush1.msra.mxu0 0.0
    %293 = vmatprep.subr.mxu0 0.0
    %294 = vmatpush1.msra.mxu0 0.0
    %295 = vmatprep.subr.mxu0 0.0
    %296 = vmatpush1.msra.mxu0 0.0
    %297 = vmatprep.subr.mxu0 0.0
    %298 = vmatpush1.msra.mxu0 0.0
    %299 = vmatprep.subr.mxu0 0.0
    %300 = vmatpush1.msra.mxu0 0.0
    %301 = vmatprep.subr.mxu0 0.0
    %302 = vmatpush1.msra.mxu0 0.0
    %303 = vmatprep.subr.mxu0 0.0
    %304 = vmatpush1.msra.mxu0 0.0
    %305 = vmatprep.subr.mxu0 0.0
    %306 = vmatpush1.msra.mxu0 0.0
    %307 = vmatprep.subr.mxu0 0.0
    %308 = vmatpush1.msra.mxu0 0.0
    %309 = vmatprep.subr.mxu0 0.0
    %310 = vmatpush1.msra.mxu0 0.0
    %311 = vmatprep.mubr.f32.mxu0 0.0
    %312 = vmatmul.mubr.f32.gmra.mrb[0].mxu0 %v224
    %v313 = vpop.f32.mrb[0].mxu0
    %v314 = vadd.f32 %v185, %v313
    %v315 = vpop.f32.mrb[0].mxu0
    %316 = vmatprep.mubr.f32.mxu0 0.0
    %317 = vmatmul.mubr.f32.gmra.mrb[0].mxu0 %v227
    %v318 = vpop.f32.mrb[0].mxu0
    %v319 = vadd.f32 %v190, %v318
    %v320 = vpop.f32.mrb[0].mxu0
    %321 = vmatprep.mubr.f32.mxu0 0.0
    %322 = vmatmul.mubr.f32.gmra.mrb[0].mxu0 %v230
    %v323 = vpop.f32.mrb[0].mxu0
    %v324 = vadd.f32 %v195, %v323
    %v325 = vpop.f32.mrb[0].mxu0
    %326 = vmatprep.mubr.f32.mxu0 0.0
    %327 = vmatmul.mubr.f32.gmra.mrb[0].mxu0 %v233
    %v328 = vpop.f32.mrb[0].mxu0
    %v329 = vadd.f32 %v200, %v328
    %v330 = vpop.f32.mrb[0].mxu0
    %331 = vmatprep.mubr.f32.mxu0 0.0
    %332 = vmatmul.mubr.f32.gmra.mrb[0].mxu0 %v236
    %v333 = vpop.f32.mrb[0].mxu0
    %v334 = vadd.f32 %v205, %v333
    %v335 = vpop.f32.mrb[0].mxu0
    %336 = vmatprep.mubr.f32.mxu0 0.0
    %337 = vmatmul.mubr.f32.gmra.mrb[0].mxu0 %v239
    %v338 = vpop.f32.mrb[0].mxu0
    %v339 = vadd.f32 %v210, %v338
    %v340 = vpop.f32.mrb[0].mxu0
    %341 = vmatprep.mubr.f32.mxu0 0.0
    %342 = vmatmul.mubr.f32.gmra.mrb[0].mxu0 %v242
    %v343 = vpop.f32.mrb[0].mxu0
    %v344 = vadd.f32 %v215, %v343
    %v345 = vpop.f32.mrb[0].mxu0
    %346 = vmatprep.mubr.f32.mxu0 0.0
    %347 = vmatmul.mubr.f32.gmra.mrb[0].mxu0 %v245
    %v348 = vpop.f32.mrb[0].mxu0
    %v349 = vadd.f32 %v220, %v348
    %v350 = vpop.f32.mrb[0].mxu0
    %351 = vdwg.mxu0
    %v352 = vmin.f32 %v314, %v334
    %v353 = vmin.f32 %v319, %v339
    %v354 = vmin.f32 %v324, %v344
    %v355 = vmin.f32 %v329, %v349
    %v356 = vmax.f32 %v314, %v334
    %v357 = vmax.f32 %v319, %v339
    %v358 = vmax.f32 %v324, %v344
    %v359 = vmax.f32 %v329, %v349
    %v360 = vld [vmem:[%s5] sm:$0xff]
    %v361 = vld [vmem:[%s5 + $0x8] sm:$0xff]
    %v362 = vld [vmem:[%s5 + $0x10] sm:$0xff]
    %v363 = vld [vmem:[%s5 + $0x18] sm:$0xff]
    %v364 = vld [vmem:[%s6] sm:$0xff]
    %v365 = vld [vmem:[%s6 + $0x8] sm:$0xff]
    %v366 = vld [vmem:[%s6 + $0x10] sm:$0xff]
    %v367 = vld [vmem:[%s6 + $0x18] sm:$0xff]
    %369 = vset.pattern.permute.xlu0 0
    %370 = vperm.xlu0 %369, %v364
    %v371 = vpop.permute.xlu0 %370
    %374 = vset.pattern.permute.xlu0 0
    %375 = vperm.xlu0 %374, %v365
    %v376 = vpop.permute.xlu0 %375
    %379 = vset.pattern.permute.xlu0 0
    %380 = vperm.xlu0 %379, %v366
    %v381 = vpop.permute.xlu0 %380
    %384 = vset.pattern.permute.xlu0 0
    %385 = vperm.xlu0 %384, %v367
    %v386 = vpop.permute.xlu0 %385
    %vm388 = vcmask 523264
    %v390 = vsel %vm388, %v360, 0
    %v393 = vsel %vm388, %v361, 0
    %v396 = vsel %vm388, %v362, 0
    %v399 = vsel %vm388, %v363, 0
    %401 = vmatprep.subr.mxu0 0.0
    %402 = vmatpush1.msra.mxu0 %v352
    %403 = vmatprep.subr.mxu0 0.0
    %404 = vmatpush1.msra.mxu0 %v353
    %405 = vmatprep.subr.mxu0 0.0
    %406 = vmatpush1.msra.mxu0 %v354
    %407 = vmatprep.subr.mxu0 0.0
    %408 = vmatpush1.msra.mxu0 %v355
    %409 = vmatprep.subr.mxu0 0.0
    %410 = vmatpush1.msra.mxu0 %v356
    %411 = vmatprep.subr.mxu0 0.0
    %412 = vmatpush1.msra.mxu0 %v357
    %413 = vmatprep.subr.mxu0 0.0
    %414 = vmatpush1.msra.mxu0 %v358
    %415 = vmatprep.subr.mxu0 0.0
    %416 = vmatpush1.msra.mxu0 %v359
    %417 = vmatprep.subr.mxu0 0.0
    %418 = vmatpush1.msra.mxu0 0.0
    %419 = vmatprep.subr.mxu0 0.0
    %420 = vmatpush1.msra.mxu0 0.0
    %421 = vmatprep.subr.mxu0 0.0
    %422 = vmatpush1.msra.mxu0 0.0
    %423 = vmatprep.subr.mxu0 0.0
    %424 = vmatpush1.msra.mxu0 0.0
    %425 = vmatprep.subr.mxu0 0.0
    %426 = vmatpush1.msra.mxu0 0.0
    %427 = vmatprep.subr.mxu0 0.0
    %428 = vmatpush1.msra.mxu0 0.0
    %429 = vmatprep.subr.mxu0 0.0
    %430 = vmatpush1.msra.mxu0 0.0
    %431 = vmatprep.subr.mxu0 0.0
    %432 = vmatpush1.msra.mxu0 0.0
    %433 = vmatprep.subr.mxu0 0.0
    %434 = vmatpush1.msra.mxu0 0.0
    %435 = vmatprep.subr.mxu0 0.0
    %436 = vmatpush1.msra.mxu0 0.0
    %437 = vmatprep.subr.mxu0 0.0
    %438 = vmatpush1.msra.mxu0 0.0
    %439 = vmatprep.subr.mxu0 0.0
    %440 = vmatpush1.msra.mxu0 0.0
    %441 = vmatprep.subr.mxu0 0.0
    %442 = vmatpush1.msra.mxu0 0.0
    %443 = vmatprep.subr.mxu0 0.0
    %444 = vmatpush1.msra.mxu0 0.0
    %445 = vmatprep.subr.mxu0 0.0
    %446 = vmatpush1.msra.mxu0 0.0
    %447 = vmatprep.subr.mxu0 0.0
    %448 = vmatpush1.msra.mxu0 0.0
    %449 = vmatprep.subr.mxu0 0.0
    %450 = vmatpush1.msra.mxu0 0.0
    %451 = vmatprep.subr.mxu0 0.0
    %452 = vmatpush1.msra.mxu0 0.0
    %453 = vmatprep.subr.mxu0 0.0
    %454 = vmatpush1.msra.mxu0 0.0
    %455 = vmatprep.subr.mxu0 0.0
    %456 = vmatpush1.msra.mxu0 0.0
    %457 = vmatprep.subr.mxu0 0.0
    %458 = vmatpush1.msra.mxu0 0.0
    %459 = vmatprep.subr.mxu0 0.0
    %460 = vmatpush1.msra.mxu0 0.0
    %461 = vmatprep.subr.mxu0 0.0
    %462 = vmatpush1.msra.mxu0 0.0
    %463 = vmatprep.subr.mxu0 0.0
    %464 = vmatpush1.msra.mxu0 0.0
    %465 = vmatprep.mubr.f32.mxu0 0.0
    %466 = vmatmul.mubr.f32.gmra.mrb[0].mxu0 %v390
    %v467 = vpop.f32.mrb[0].mxu0
    %v468 = vadd.f32 %v371, %v467
    %v469 = vpop.f32.mrb[0].mxu0
    %470 = vmatprep.mubr.f32.mxu0 0.0
    %471 = vmatmul.mubr.f32.gmra.mrb[0].mxu0 %v393
    %v472 = vpop.f32.mrb[0].mxu0
    %v473 = vadd.f32 %v376, %v472
    %v474 = vpop.f32.mrb[0].mxu0
    %475 = vmatprep.mubr.f32.mxu0 0.0
    %476 = vmatmul.mubr.f32.gmra.mrb[0].mxu0 %v396
    %v477 = vpop.f32.mrb[0].mxu0
    %v478 = vadd.f32 %v381, %v477
    %v479 = vpop.f32.mrb[0].mxu0
    %480 = vmatprep.mubr.f32.mxu0 0.0
    %481 = vmatmul.mubr.f32.gmra.mrb[0].mxu0 %v399
    %v482 = vpop.f32.mrb[0].mxu0
    %v483 = vadd.f32 %v386, %v482
    %v484 = vpop.f32.mrb[0].mxu0
    %485 = vdwg.mxu0
    %v486 = vmin.f32 %v468, %v478
    %v487 = vmin.f32 %v473, %v483
    %v488 = vmax.f32 %v468, %v478
    %v489 = vmax.f32 %v473, %v483
    %v490 = vld [vmem:[%s7] sm:$0xff]
    %v492 = vsel %vm222, %v490, 0
    %494 = vmatprep.subr.mxu0 0.0
    %495 = vmatpush1.msra.mxu0 %v486
    %496 = vmatprep.subr.mxu0 0.0
    %497 = vmatpush1.msra.mxu0 %v487
    %498 = vmatprep.subr.mxu0 0.0
    %499 = vmatpush1.msra.mxu0 %v488
    %500 = vmatprep.subr.mxu0 0.0
    %501 = vmatpush1.msra.mxu0 %v489
    %502 = vmatprep.subr.mxu0 0.0
    %503 = vmatpush1.msra.mxu0 0.0
    %504 = vmatprep.subr.mxu0 0.0
    %505 = vmatpush1.msra.mxu0 0.0
    %506 = vmatprep.subr.mxu0 0.0
    %507 = vmatpush1.msra.mxu0 0.0
    %508 = vmatprep.subr.mxu0 0.0
    %509 = vmatpush1.msra.mxu0 0.0
    %510 = vmatprep.subr.mxu0 0.0
    %511 = vmatpush1.msra.mxu0 0.0
    %512 = vmatprep.subr.mxu0 0.0
    %513 = vmatpush1.msra.mxu0 0.0
    %514 = vmatprep.subr.mxu0 0.0
    %515 = vmatpush1.msra.mxu0 0.0
    %516 = vmatprep.subr.mxu0 0.0
    %517 = vmatpush1.msra.mxu0 0.0
    %518 = vmatprep.subr.mxu0 0.0
    %519 = vmatpush1.msra.mxu0 0.0
    %520 = vmatprep.subr.mxu0 0.0
    %521 = vmatpush1.msra.mxu0 0.0
    %522 = vmatprep.subr.mxu0 0.0
    %523 = vmatpush1.msra.mxu0 0.0
    %524 = vmatprep.subr.mxu0 0.0
    %525 = vmatpush1.msra.mxu0 0.0
    %526 = vmatprep.subr.mxu0 0.0
    %527 = vmatpush1.msra.mxu0 0.0
    %528 = vmatprep.subr.mxu0 0.0
    %529 = vmatpush1.msra.mxu0 0.0
    %530 = vmatprep.subr.mxu0 0.0
    %531 = vmatpush1.msra.mxu0 0.0
    %532 = vmatprep.subr.mxu0 0.0
    %533 = vmatpush1.msra.mxu0 0.0
    %534 = vmatprep.subr.mxu0 0.0
    %535 = vmatpush1.msra.mxu0 0.0
    %536 = vmatprep.subr.mxu0 0.0
    %537 = vmatpush1.msra.mxu0 0.0
    %538 = vmatprep.subr.mxu0 0.0
    %539 = vmatpush1.msra.mxu0 0.0
    %540 = vmatprep.subr.mxu0 0.0
    %541 = vmatpush1.msra.mxu0 0.0
    %542 = vmatprep.subr.mxu0 0.0
    %543 = vmatpush1.msra.mxu0 0.0
    %544 = vmatprep.subr.mxu0 0.0
    %545 = vmatpush1.msra.mxu0 0.0
    %546 = vmatprep.subr.mxu0 0.0
    %547 = vmatpush1.msra.mxu0 0.0
    %548 = vmatprep.subr.mxu0 0.0
    %549 = vmatpush1.msra.mxu0 0.0
    %550 = vmatprep.subr.mxu0 0.0
    %551 = vmatpush1.msra.mxu0 0.0
    %552 = vmatprep.subr.mxu0 0.0
    %553 = vmatpush1.msra.mxu0 0.0
    %554 = vmatprep.subr.mxu0 0.0
    %555 = vmatpush1.msra.mxu0 0.0
    %556 = vmatprep.subr.mxu0 0.0
    %557 = vmatpush1.msra.mxu0 0.0
    %558 = vmatprep.mubr.f32.mxu0 0.0
    %559 = vmatmul.mubr.f32.gmra.mrb[0].mxu0 %v492
    %v560 = vpop.f32.mrb[0].mxu0
    %v561 = vadd.f32 0.0, %v560
    %v562 = vpop.f32.mrb[0].mxu0
    %563 = vdwg.mxu0
    %v564 = vld [vmem:[#allocation2] sm:$0x1]
    %566 = vset.pattern.permute.xlu0 0
    %567 = vperm.xlu0 %566, %v564
    %v568 = vpop.permute.xlu0 %567
    %v570 = vlaneseq
    %v571 = vshrl.u32 %v570, 7
    %v572 = vsub.s32 0, %v571
    %v573 = vrot.slane %v568, %v572
    %v574 = vadd.f32 %v561, %v573
    %vm575 = vcmask 57344
    %576 = vst.msk [vmem:[#allocation3] sm:$0x1] %vm575, %v574
    // Predicated region
    $region38: #{tpu_custom_call.1} parent=1 // pred_check
      _
    $region39: #{tpu_custom_call.1} parent=1 // pred_check_branch
      %578 = sbr.rel (0) target = $region41
    $region40: #{tpu_custom_call.1} parent=1 // pred_region
      %s580 = ssub.s32 16, 16
      %581 = vsyncadd [#allocation4], %s580
      %s583 = sshll.u32 [#allocation3], 4
      %s584 = int_to_ptr.vmem [resolvable:$true] %s583
      %586 = dma.vmem_to_hbm [thread:$0]  %s584, 16, %s9, [#allocation4]
    $region41: #{tpu_custom_call.1} parent=1 // pred_fallthru
      _
    // Predicated region
    $region42: #{tpu_custom_call.1} parent=1 // pred_check
      _
    $region43: #{tpu_custom_call.1} parent=1 // pred_check_branch
      %588 = sbr.rel (0) target = $region45
    $region44: #{tpu_custom_call.1} parent=1 // pred_region
      %589 = dma.done [#allocation4], 16
    $region45: #{tpu_custom_call.1} parent=1 // pred_fallthru
      _
    %590 = vsyncpa [#allocation4], 1

</llo_original>
